<compile_context>
chip_gen: v7x
topology: tpu7x:2x2x1
jax: 0.10.0
libtpu: 0.0.40
codegen_flags: <defaults>
</compile_context>

<pallas_src>
import functools

import jax
import jax.numpy as jnp
from jax.experimental import pallas as pl
from jax.experimental.pallas import tpu as pltpu


def ffn_kernel(x_ref, w1_ref, b1_ref, w2_ref, b2_ref, o_ref, acc_ref):
    # x_ref:  (tm, D)  bf16      w1_ref: (D, tk) bf16      b1_ref: (1, tk) f32
    # w2_ref: (tk, D)  bf16      b2_ref: (1, D)  f32
    # o_ref:  (tm, D)  out dtype acc_ref: (tm, D) f32 scratch accumulator
    k = pl.program_id(1)

    @pl.when(k == 0)
    def _():
        acc_ref[...] = jnp.zeros_like(acc_ref)

    # Matmul 1 (MXU, bf16 operands, f32 accumulation); bias + ReLU in f32 (VPU).
    h = jnp.dot(x_ref[...], w1_ref[...], preferred_element_type=jnp.float32)
    h = jnp.maximum(h + b1_ref[...], 0.0)
    # Dropout(drop_p) in eval mode == identity.
    # Matmul 2: recast post-ReLU activations to bf16 for the MXU; accumulate in f32.
    acc_ref[...] += jnp.dot(h.astype(w2_ref.dtype), w2_ref[...],
                            preferred_element_type=jnp.float32)

    @pl.when(k == pl.num_programs(1) - 1)
    def _():
        o_ref[...] = (acc_ref[...] + b2_ref[...]).astype(o_ref.dtype)


def _round_up(x, m):
    return ((x + m - 1) // m) * m


_TILE_DEFAULTS = {      # (tm, tk_max) per TPU generation
    "v5e": (512, 512),
    "v5p": (512, 512),
    "v6e": (1024, 512),
    "v7x": (512, 256),
}


def _tpu_generation():
    try:
        kind = jax.devices()[0].device_kind.lower()
    except Exception:
        return "unknown"
    if "v6" in kind:
        return "v6e"
    if "7" in kind:
        return "v7x"
    if "v5 lite" in kind or "v5e" in kind or "v5lite" in kind:
        return "v5e"
    if "v5" in kind:
        return "v5p"
    return "unknown"


def _vmem_budget_bytes(gen):
    try:
        cap = int(pltpu.get_tpu_info().vmem_capacity_bytes)
        if cap <= 0:
            raise ValueError("bad vmem capacity")
    except Exception:
        cap = (64 << 20) if gen == "v7x" else (128 << 20)
    # Never request all of physical VMEM: leave headroom for Mosaic internal scratch.
    return (cap * 13) // 16     # 128 MiB -> 104 MiB, 64 MiB -> 52 MiB


def _largest_tk(d_ff, tk_max):
    # Largest 128-multiple divisor of d_ff that is <= tk_max; else stream d_ff whole.
    best = 0
    cand = 128
    while cand <= min(tk_max, d_ff):
        if d_ff % cand == 0:
            best = cand
        cand += 128
    return best if best > 0 else d_ff


def _tile_vmem_bytes(tm, tk, d_model, x_bytes, out_bytes):
    two = 2  # double-buffered pipeline stages
    b = 0
    b += two * tm * d_model * x_bytes      # x tile (bf16)
    b += two * d_model * tk * 2            # W1 column chunk (bf16)
    b += two * tk * 4                      # b1 chunk (f32)
    b += two * tk * d_model * 2            # W2 row chunk (bf16)
    b += two * d_model * 4                 # b2 (f32)
    b += two * tm * d_model * out_bytes    # output tile
    b += tm * d_model * 4                  # f32 accumulator scratch
    b += tm * tk * (4 + 2)                 # h temp (f32) + its bf16 cast copy
    return b


def _pick_tiles(M, d_ff, d_model, x_bytes, out_bytes, gen, budget, tm_req, tk_req):
    tm, tk_max = _TILE_DEFAULTS.get(gen, (512, 512))
    if tm_req is not None:
        tm = tm_req
    if tk_req is not None:
        tk_max = tk_req
    # v7x has 2 TensorCores: keep at least two row tiles so the "parallel" axis shards.
    if gen == "v7x" and M > 256:
        tm = min(tm, _round_up(pl.cdiv(M, 2), 256))
    # Never exceed the (8-aligned) row count; keep sublane alignment.
    tm = min(tm, _round_up(M, 8))
    tm = max(8, _round_up(tm, 8))
    tk = _largest_tk(d_ff, tk_max)
    # Shrink tiles until the working set fits the VMEM budget (with slack for Mosaic).
    while _tile_vmem_bytes(tm, tk, d_model, x_bytes, out_bytes) + (8 << 20) > budget:
        if tm > 256:
            tm = max(256, _round_up(tm // 2, 8))
        elif tk > 128:
            new_tk = _largest_tk(d_ff, tk // 2)
            if new_tk == tk:
                break
            tk = new_tk
        else:
            break
    return tm, tk


@functools.partial(jax.jit, static_argnames=("tm", "tk"))
def feed_forward(x, w1, b1, w2, b2, *, tm=None, tk=None):
    """x: (B, S, d_model); w1: (d_model, d_ff); w2: (d_ff, d_model)."""
    B, S, D = x.shape
    d_ff = w1.shape[1]
    M = B * S

    out_dtype = x.dtype
    out_bytes = jnp.dtype(out_dtype).itemsize

    # MXU operands in bf16 (weights should be pre-cast once at setup; astype is then a
    # no-op). Biases stay f32 for the VPU bias+ReLU path (safe on v5e).
    x2 = x.reshape(M, D)
    x2 = x2 if x2.dtype == jnp.bfloat16 else x2.astype(jnp.bfloat16)
    w1b = w1 if w1.dtype == jnp.bfloat16 else w1.astype(jnp.bfloat16)
    w2b = w2 if w2.dtype == jnp.bfloat16 else w2.astype(jnp.bfloat16)
    b1f = b1.reshape(1, d_ff).astype(jnp.float32)
    b2f = b2.reshape(1, D).astype(jnp.float32)

    gen = _tpu_generation()
    budget = _vmem_budget_bytes(gen)
    tm, tk = _pick_tiles(M, d_ff, D, 2, out_bytes, gen, budget, tm, tk)

    n_rows = pl.cdiv(M, tm)      # last row tile may be partial; Pallas masks it
    k_steps = pl.cdiv(d_ff, tk)  # tk divides d_ff (or equals it) by construction

    needed = _tile_vmem_bytes(tm, tk, D, 2, out_bytes)
    vmem_limit = int(min(max(needed + (8 << 20), 32 << 20), budget))

    cost = pl.CostEstimate(
        flops=4 * M * D * d_ff,  # two matmuls, 2*M*D*d_ff flops each
        transcendentals=0,
        bytes_accessed=int(
            M * D * 2 + M * D * out_bytes                       # x read + out write
            + n_rows * (2 * D * d_ff * 2 + d_ff * 4 + D * 4)    # W1/W2/biases per row tile
        ),
    )

    out = pl.pallas_call(
        ffn_kernel,
        out_shape=jax.ShapeDtypeStruct((M, D), out_dtype),
        grid_spec=pltpu.PrefetchScalarGridSpec(
            num_scalar_prefetch=0,
            grid=(n_rows, k_steps),  # reduction axis (d_ff) last
            in_specs=[
                pl.BlockSpec((tm, D), lambda i, k: (i, 0)),   # x rows (constant over k)
                pl.BlockSpec((D, tk), lambda i, k: (0, k)),   # W1 column chunk
                pl.BlockSpec((1, tk), lambda i, k: (0, k)),   # b1 chunk
                pl.BlockSpec((tk, D), lambda i, k: (k, 0)),   # W2 row chunk
                pl.BlockSpec((1, D), lambda i, k: (0, 0)),    # b2 (grid-constant)
            ],
            out_specs=pl.BlockSpec((tm, D), lambda i, k: (i, 0)),
            scratch_shapes=[pltpu.VMEM((tm, D), jnp.float32)],
        ),
        compiler_params=pltpu.CompilerParams(
            dimension_semantics=("parallel", "arbitrary"),
            vmem_limit_bytes=vmem_limit,
        ),
        cost_estimate=cost,
    )(x2, w1b, b1f, w2b, b2f)

    return out.reshape(B, S, D)


def init_params(key, d_model, d_ff, dtype=jnp.float32):
    # Deterministic init mimicking nn.Linear: U(-1/sqrt(fan_in), 1/sqrt(fan_in)).
    k1, k2, k3, k4 = jax.random.split(key, 4)
    bound1 = 1.0 / (d_model ** 0.5)
    bound2 = 1.0 / (d_ff ** 0.5)
    w1 = jax.random.uniform(k1, (d_model, d_ff), dtype, -bound1, bound1)
    b1 = jax.random.uniform(k2, (d_ff,), dtype, -bound1, bound1)
    w2 = jax.random.uniform(k3, (d_ff, d_model), dtype, -bound2, bound2)
    b2 = jax.random.uniform(k4, (d_model,), dtype, -bound2, bound2)
    return w1, b1, w2, b2


if __name__ == "__main__":
    d_model, d_ff, drop_p = 128, 256, 0.1  # lane-aligned sizes; drop_p unused in eval mode
    B, S = 2, 8

    key = jax.random.PRNGKey(0)
    kx, kp = jax.random.split(key)
    x = jax.random.normal(kx, (B, S, d_model), jnp.float32)
    w1, b1, w2, b2 = init_params(kp, d_model, d_ff)

    # Pre-cast the MXU weight operands to bf16 ONCE at setup (not per call).
    w1b = w1.astype(jnp.bfloat16)
    w2b = w2.astype(jnp.bfloat16)

    out = feed_forward(x, w1b, b1, w2b, b2)
    out = jax.block_until_ready(out)

    # Reference (pure JAX) at matching precision: bf16 operands, f32 accumulation.
    f32 = jnp.float32
    xr = x.reshape(-1, d_model).astype(jnp.bfloat16).astype(f32)
    w1r = w1b.astype(f32)
    w2r = w2b.astype(f32)
    h_ref = jnp.maximum(xr @ w1r + b1, 0.0).astype(jnp.bfloat16).astype(f32)
    ref = (h_ref @ w2r + b2).reshape(B, S, d_model)
    assert jnp.allclose(out, ref, atol=1e-2, rtol=1e-2), "mismatch vs reference"

    print("KERNEL_OK")
</pallas_src>

<mosaic_0001>
module attributes {stable_mosaic.version = 11 : i64} {
  func.func @ffn_kernel(%arg0: i32, %arg1: i32, %arg2: memref<16x128xbf16, #tpu.memory_space<vmem>>, %arg3: memref<128x256xbf16, #tpu.memory_space<vmem>>, %arg4: memref<1x256xf32, #tpu.memory_space<vmem>>, %arg5: memref<256x128xbf16, #tpu.memory_space<vmem>>, %arg6: memref<1x128xf32, #tpu.memory_space<vmem>>, %arg7: memref<16x128xf32, #tpu.memory_space<vmem>>, %arg8: memref<16x128xf32, #tpu.memory_space<vmem>>) attributes {dimension_semantics = [#tpu.dimension_semantics<parallel>, #tpu.dimension_semantics<arbitrary>], iteration_bounds = array<i64: 1, 1>, scalar_prefetch = 0 : i64, scratch_operands = 1 : i64, tpu.core_type = #tpu.core_type<tc>, window_params = [{transform_indices = @transform_0, window_bounds = array<i64: 16, 128>}, {transform_indices = @transform_1, window_bounds = array<i64: 128, 256>}, {transform_indices = @transform_2, window_bounds = array<i64: 1, 256>}, {transform_indices = @transform_3, window_bounds = array<i64: 256, 128>}, {pipeline_mode = #tpu.pipeline_mode<synchronous>, transform_indices = @transform_4, window_bounds = array<i64: 1, 128>}, {transform_indices = @transform_5, window_bounds = array<i64: 16, 128>}]} {
    %c0_i32 = arith.constant 0 : i32
    %0 = arith.cmpi eq, %arg1, %c0_i32 : i32
    %1 = arith.extui %0 : i1 to i32
    %c0_i32_0 = arith.constant 0 : i32
    %2 = arith.cmpi ne, %1, %c0_i32_0 : i32
    scf.if %2 {
      %cst_16 = arith.constant 0.000000e+00 : f32
      %20 = vector.broadcast %cst_16 : f32 to vector<16x128xf32>
      %c0_17 = arith.constant 0 : index
      %c0_18 = arith.constant 0 : index
      %21 = vector.load %arg8[%c0_17, %c0_18] : memref<16x128xf32, #tpu.memory_space<vmem>>, vector<16x128xf32>
      tpu.vector_store %arg8[%c0_17, %c0_18], %20 {strides = array<i32>} : memref<16x128xf32, #tpu.memory_space<vmem>>, vector<16x128xf32>,
    } else {
    }
    %c0 = arith.constant 0 : index
    %c0_1 = arith.constant 0 : index
    %3 = vector.load %arg2[%c0, %c0_1] : memref<16x128xbf16, #tpu.memory_space<vmem>>, vector<16x128xbf16>
    %c0_2 = arith.constant 0 : index
    %c0_3 = arith.constant 0 : index
    %4 = vector.load %arg3[%c0_2, %c0_3] : memref<128x256xbf16, #tpu.memory_space<vmem>>, vector<128x256xbf16>
    %cst = arith.constant dense<0.000000e+00> : vector<16x256xf32>
    %5 = tpu.matmul %3, %4, %cst {dimension_numbers = #tpu.dot_dimension_numbers<[1], [0], [0], [1], [0, 0, 1, 1], [], []>} : vector<16x128xbf16>, vector<128x256xbf16>, vector<16x256xf32> -> vector<16x256xf32>
    %c0_4 = arith.constant 0 : index
    %c0_5 = arith.constant 0 : index
    %6 = vector.load %arg4[%c0_4, %c0_5] : memref<1x256xf32, #tpu.memory_space<vmem>>, vector<1x256xf32>
    %7 = vector.broadcast %6 : vector<1x256xf32> to vector<16x256xf32>
    %8 = arith.addf %5, %7 : vector<16x256xf32>
    %cst_6 = arith.constant 0.000000e+00 : f32
    %9 = vector.broadcast %cst_6 : f32 to vector<16x256xf32>
    %10 = arith.maximumf %8, %9 : vector<16x256xf32>
    %c0_7 = arith.constant 0 : index
    %c0_8 = arith.constant 0 : index
    %11 = vector.load %arg8[%c0_7, %c0_8] : memref<16x128xf32, #tpu.memory_space<vmem>>, vector<16x128xf32>
    %12 = arith.truncf %10 : vector<16x256xf32> to vector<16x256xbf16>
    %c0_9 = arith.constant 0 : index
    %c0_10 = arith.constant 0 : index
    %13 = vector.load %arg5[%c0_9, %c0_10] : memref<256x128xbf16, #tpu.memory_space<vmem>>, vector<256x128xbf16>
    %cst_11 = arith.constant dense<0.000000e+00> : vector<16x128xf32>
    %14 = tpu.matmul %12, %13, %cst_11 {dimension_numbers = #tpu.dot_dimension_numbers<[1], [0], [0], [1], [0, 0, 1, 1], [], []>} : vector<16x256xbf16>, vector<256x128xbf16>, vector<16x128xf32> -> vector<16x128xf32>
    %15 = arith.addf %11, %14 : vector<16x128xf32>
    %c0_12 = arith.constant 0 : index
    %c0_13 = arith.constant 0 : index
    %16 = vector.load %arg8[%c0_12, %c0_13] : memref<16x128xf32, #tpu.memory_space<vmem>>, vector<16x128xf32>
    tpu.vector_store %arg8[%c0_12, %c0_13], %15 {strides = array<i32>} : memref<16x128xf32, #tpu.memory_space<vmem>>, vector<16x128xf32>,
    %c0_i32_14 = arith.constant 0 : i32
    %17 = arith.cmpi eq, %arg1, %c0_i32_14 : i32
    %18 = arith.extui %17 : i1 to i32
    %c0_i32_15 = arith.constant 0 : i32
    %19 = arith.cmpi ne, %18, %c0_i32_15 : i32
    scf.if %19 {
      %c0_16 = arith.constant 0 : index
      %c0_17 = arith.constant 0 : index
      %20 = vector.load %arg8[%c0_16, %c0_17] : memref<16x128xf32, #tpu.memory_space<vmem>>, vector<16x128xf32>
      %c0_18 = arith.constant 0 : index
      %c0_19 = arith.constant 0 : index
      %21 = vector.load %arg6[%c0_18, %c0_19] : memref<1x128xf32, #tpu.memory_space<vmem>>, vector<1x128xf32>
      %22 = vector.broadcast %21 : vector<1x128xf32> to vector<16x128xf32>
      %23 = arith.addf %20, %22 : vector<16x128xf32>
      %c0_20 = arith.constant 0 : index
      %c0_21 = arith.constant 0 : index
      %24 = vector.load %arg7[%c0_20, %c0_21] : memref<16x128xf32, #tpu.memory_space<vmem>>, vector<16x128xf32>
      tpu.vector_store %arg7[%c0_20, %c0_21], %23 {strides = array<i32>} : memref<16x128xf32, #tpu.memory_space<vmem>>, vector<16x128xf32>,
    } else {
    }
    return
  }
  func.func @transform_0(%arg0: i32, %arg1: i32) -> (i32, i32) {
    %c0_i32 = arith.constant 0 : i32
    %c0_i32_0 = arith.constant 0 : i32
    return %arg0, %c0_i32 : i32, i32
  }
  func.func @transform_1(%arg0: i32, %arg1: i32) -> (i32, i32) {
    %c0_i32 = arith.constant 0 : i32
    %c0_i32_0 = arith.constant 0 : i32
    return %c0_i32, %arg1 : i32, i32
  }
  func.func @transform_2(%arg0: i32, %arg1: i32) -> (i32, i32) {
    %c0_i32 = arith.constant 0 : i32
    %c0_i32_0 = arith.constant 0 : i32
    return %c0_i32, %arg1 : i32, i32
  }
  func.func @transform_3(%arg0: i32, %arg1: i32) -> (i32, i32) {
    %c0_i32 = arith.constant 0 : i32
    %c0_i32_0 = arith.constant 0 : i32
    return %arg1, %c0_i32 : i32, i32
  }
  func.func @transform_4(%arg0: i32, %arg1: i32) -> (i32, i32) {
    %c0_i32 = arith.constant 0 : i32
    %c0_i32_0 = arith.constant 0 : i32
    %c0_i32_1 = arith.constant 0 : i32
    return %c0_i32, %c0_i32_0 : i32, i32
  }
  func.func @transform_5(%arg0: i32, %arg1: i32) -> (i32, i32) {
    %c0_i32 = arith.constant 0 : i32
    %c0_i32_0 = arith.constant 0 : i32
    return %arg0, %c0_i32 : i32, i32
  }
}

</mosaic_0001>

<llo_original>
// kernel: feed_forward.1
$region0: #{feed_forward.1}
  #allocation0 [shape = 'u32[]', space=smem, size = 0x4, offset = 0x4, fixed_abs, tag = 'smem constant byte address 0x4 - core index']
  #allocation1 [shape = 'u32[144,128]{1,0:T(1,128)}', space=vmem, size = 0x12000, scoped, tag = 'internal scratch']
  #allocation2 [shape = 'f32[16,128]{1,0:T(8,128)}', space=vmem, size = 0x2000, scoped, tag = 'scratch operand']
  %s0 = inlined_call_operand.vmem [shape: bf16[16,128], index: 0, kind: input, shape index: {}]
  %s1 = inlined_call_operand.hbm [shape: bf16[128,256], index: 1, kind: input, shape index: {}]
  %s2 = inlined_call_operand.vmem [shape: f32[1,256], index: 2, kind: input, shape index: {}]
  %s3 = inlined_call_operand.hbm [shape: bf16[256,128], index: 3, kind: input, shape index: {}]
  %s4 = inlined_call_operand.vmem [shape: f32[1,128], index: 4, kind: input, shape index: {}]
  %s5 = inlined_call_operand.hbm [shape: f32[16,128], index: 5, kind: output, shape index: {}]
  %s6 = sld [smem:[#allocation0]]
  $region46: #{feed_forward.1} parent=0
    _
  %s8 = ssub.s32 1, %s6
  %s9 = scalar_select 0, %s8, %s6
  $region1: #{feed_forward.1} parent=0
    #allocation3 [shape = 'u8[65536]{0}', space=vmem, size = 0x10000, scoped, tag = 'input window, operand 1, single buffered']
    #allocation4 [shape = 's32[1]{0}', space=sflag, size = 0x4, scoped, tag = 'scoped memory for feed_forward.1']
    #allocation5 [shape = 's32[1]{0}', space=sflag, size = 0x4, scoped, tag = 'scoped memory for feed_forward.1']
    #allocation6 [shape = 'u8[65536]{0}', space=vmem, size = 0x10000, scoped, tag = 'input window, operand 3, single buffered']
    #allocation7 [shape = 's32[1]{0}', space=sflag, size = 0x4, scoped, tag = 'scoped memory for feed_forward.1']
    #allocation8 [shape = 'u8[8192]{0}', space=vmem, size = 0x2000, scoped, tag = 'output window, operand 0, single buffered']
    %10 = vsyncpa [#allocation4], 0
    %11 = vsyncpa [#allocation7], 0
    %12 = vsyncpa [#allocation5], 0
    // Predicated region
    $region2: #{feed_forward.1} parent=1 // pred_check
      _
    $region3: #{feed_forward.1} parent=1 // pred_check_branch
      %14 = sbr.rel (0) target = $region5
    $region4: #{feed_forward.1} parent=1 // pred_region
      _
    $region5: #{feed_forward.1} parent=1 // pred_fallthru
      _
    // Predicated region
    $region6: #{feed_forward.1} parent=1 // pred_check
      _
    $region7: #{feed_forward.1} parent=1 // pred_check_branch
      %16 = sbr.rel (0) target = $region9
    $region8: #{feed_forward.1} parent=1 // pred_region
      %s18 = ssub.s32 2048, 2048
      %19 = vsyncadd [#allocation4], %s18
      %s20 = sshll.u32 [#allocation3], 4
      %s21 = int_to_ptr.vmem [resolvable:$true] %s20
      %26 = dma.hbm_to_vmem [thread:$0]  %s1, 2048, %s21, [#allocation4], 128, 128, 8
    $region9: #{feed_forward.1} parent=1 // pred_fallthru
      _
    // Predicated region
    $region10: #{feed_forward.1} parent=1 // pred_check
      _
    $region11: #{feed_forward.1} parent=1 // pred_check_branch
      %28 = sbr.rel (0) target = $region13
    $region12: #{feed_forward.1} parent=1 // pred_region
      _
    $region13: #{feed_forward.1} parent=1 // pred_fallthru
      _
    // Predicated region
    $region14: #{feed_forward.1} parent=1 // pred_check
      _
    $region15: #{feed_forward.1} parent=1 // pred_check_branch
      %30 = sbr.rel (0) target = $region17
    $region16: #{feed_forward.1} parent=1 // pred_region
      %s32 = ssub.s32 2048, 2048
      %33 = vsyncadd [#allocation7], %s32
      %s34 = sshll.u32 [#allocation6], 4
      %s35 = int_to_ptr.vmem [resolvable:$true] %s34
      %40 = dma.hbm_to_vmem [thread:$0]  %s3, 2048, %s35, [#allocation7], 64, 64, 4
    $region17: #{feed_forward.1} parent=1 // pred_fallthru
      _
    // Predicated region
    $region18: #{feed_forward.1} parent=1 // pred_check
      _
    $region19: #{feed_forward.1} parent=1 // pred_check_branch
      %42 = sbr.rel (0) target = $region21
    $region20: #{feed_forward.1} parent=1 // pred_region
      _
    $region21: #{feed_forward.1} parent=1 // pred_fallthru
      _
    // Predicated region
    $region22: #{feed_forward.1} parent=1 // pred_check
      _
    $region23: #{feed_forward.1} parent=1 // pred_check_branch
      %44 = sbr.rel (0) target = $region25
    $region24: #{feed_forward.1} parent=1 // pred_region
      %45 = dma.done [#allocation4], 2048
    $region25: #{feed_forward.1} parent=1 // pred_fallthru
      _
    // Predicated region
    $region26: #{feed_forward.1} parent=1 // pred_check
      _
    $region27: #{feed_forward.1} parent=1 // pred_check_branch
      %47 = sbr.rel (0) target = $region29
    $region28: #{feed_forward.1} parent=1 // pred_region
      %48 = dma.done [#allocation7], 2048
    $region29: #{feed_forward.1} parent=1 // pred_fallthru
      _
    %p50 = scmp.eq.s32.totalorder 0, 0
    // Predicated region
    $region30: #{feed_forward.1} parent=1 // pred_check
      %p51 = pneg %p50
    $region31: #{feed_forward.1} parent=1 // pred_check_branch
      %53 = sbr.rel (%p51) target = $region33
    $region32: #{feed_forward.1} parent=1 // pred_region
      %54 = vst [vmem:[#allocation2] sm:$0xff] 0.0
      %55 = vst [vmem:[#allocation2 + $0x8] sm:$0xff] 0.0
    $region33: #{feed_forward.1} parent=1 // pred_fallthru
      _
    %v56 = vld [vmem:[%s0] sm:$0xf]
    %v57 = vld [vmem:[%s0 + $0x4] sm:$0xf]
    %v58 = vld [vmem:[#allocation3] sm:$0xff]
    %v59 = vld [vmem:[#allocation3 + $0x8] sm:$0xff]
    %v60 = vld [vmem:[#allocation3 + $0x10] sm:$0xff]
    %v61 = vld [vmem:[#allocation3 + $0x18] sm:$0xff]
    %v62 = vld [vmem:[#allocation3 + $0x20] sm:$0xff]
    %v63 = vld [vmem:[#allocation3 + $0x28] sm:$0xff]
    %v64 = vld [vmem:[#allocation3 + $0x30] sm:$0xff]
    %v65 = vld [vmem:[#allocation3 + $0x38] sm:$0xff]
    %v66 = vld [vmem:[#allocation3 + $0x40] sm:$0xff]
    %v67 = vld [vmem:[#allocation3 + $0x48] sm:$0xff]
    %v68 = vld [vmem:[#allocation3 + $0x50] sm:$0xff]
    %v69 = vld [vmem:[#allocation3 + $0x58] sm:$0xff]
    %v70 = vld [vmem:[#allocation3 + $0x60] sm:$0xff]
    %v71 = vld [vmem:[#allocation3 + $0x68] sm:$0xff]
    %v72 = vld [vmem:[#allocation3 + $0x70] sm:$0xff]
    %v73 = vld [vmem:[#allocation3 + $0x78] sm:$0xff]
    %v74 = vld [vmem:[%s2] sm:$0x3]
    %v76 = vlaneseq
    %v77 = vshrl.u32 %v76, 7
    %v78 = vsub.s32 0, %v77
    %v79 = vrot.slane %v74, %v78
    %v80 = vlaneseq
    %v81 = vshrl.u32 %v80, 7
    %v82 = vsub.s32 1, %v81
    %v83 = vrot.slane %v74, %v82
    %v88 = vunpack.c.l.b16 %v56
    %v89 = vunpack.c.l.b16 %v57
    %v90 = vpack.c.b16 %v89, %v88
    %v108 = vunpack.c.l.b16 %v58
    %v109 = vunpack.c.h.b16 %v58
    %v110 = vunpack.c.l.b16 %v59
    %v111 = vunpack.c.h.b16 %v59
    %v112 = vunpack.c.l.b16 %v60
    %v113 = vunpack.c.h.b16 %v60
    %v114 = vunpack.c.l.b16 %v61
    %v115 = vunpack.c.h.b16 %v61
    %v116 = vunpack.c.l.b16 %v62
    %v117 = vunpack.c.h.b16 %v62
    %v118 = vunpack.c.l.b16 %v63
    %v119 = vunpack.c.h.b16 %v63
    %v120 = vunpack.c.l.b16 %v64
    %v121 = vunpack.c.h.b16 %v64
    %v122 = vunpack.c.l.b16 %v65
    %v123 = vunpack.c.h.b16 %v65
    %v124 = vunpack.c.l.b16 %v66
    %v125 = vunpack.c.h.b16 %v66
    %v126 = vunpack.c.l.b16 %v67
    %v127 = vunpack.c.h.b16 %v67
    %v128 = vunpack.c.l.b16 %v68
    %v129 = vunpack.c.h.b16 %v68
    %v130 = vunpack.c.l.b16 %v69
    %v131 = vunpack.c.h.b16 %v69
    %v132 = vunpack.c.l.b16 %v70
    %v133 = vunpack.c.h.b16 %v70
    %v134 = vunpack.c.l.b16 %v71
    %v135 = vunpack.c.h.b16 %v71
    %v136 = vunpack.c.l.b16 %v72
    %v137 = vunpack.c.h.b16 %v72
    %v138 = vunpack.c.l.b16 %v73
    %v139 = vunpack.c.h.b16 %v73
    %v140 = vpack.c.b16 %v110, %v108
    %v141 = vpack.c.b16 %v111, %v109
    %v142 = vpack.c.b16 %v114, %v112
    %v143 = vpack.c.b16 %v115, %v113
    %v144 = vpack.c.b16 %v118, %v116
    %v145 = vpack.c.b16 %v119, %v117
    %v146 = vpack.c.b16 %v122, %v120
    %v147 = vpack.c.b16 %v123, %v121
    %v148 = vpack.c.b16 %v126, %v124
    %v149 = vpack.c.b16 %v127, %v125
    %v150 = vpack.c.b16 %v130, %v128
    %v151 = vpack.c.b16 %v131, %v129
    %v152 = vpack.c.b16 %v134, %v132
    %v153 = vpack.c.b16 %v135, %v133
    %v154 = vpack.c.b16 %v138, %v136
    %v155 = vpack.c.b16 %v139, %v137
    %172 = vmatprep.subr.bf16.mxu0 %v141
    %173 = vmatpush1.bf16.msra.mxu0 %v140
    %174 = vmatprep.subr.bf16.mxu0 %v143
    %175 = vmatpush1.bf16.msra.mxu0 %v142
    %176 = vmatprep.subr.bf16.mxu0 %v145
    %177 = vmatpush1.bf16.msra.mxu0 %v144
    %178 = vmatprep.subr.bf16.mxu0 %v147
    %179 = vmatpush1.bf16.msra.mxu0 %v146
    %180 = vmatprep.subr.bf16.mxu0 %v149
    %181 = vmatpush1.bf16.msra.mxu0 %v148
    %182 = vmatprep.subr.bf16.mxu0 %v151
    %183 = vmatpush1.bf16.msra.mxu0 %v150
    %184 = vmatprep.subr.bf16.mxu0 %v153
    %185 = vmatpush1.bf16.msra.mxu0 %v152
    %186 = vmatprep.subr.bf16.mxu0 %v155
    %187 = vmatpush1.bf16.msra.mxu0 %v154
    %188 = vmatprep.subr.bf16.mxu0 0
    %189 = vmatpush1.bf16.msra.mxu0 0
    %190 = vmatprep.subr.bf16.mxu0 0
    %191 = vmatpush1.bf16.msra.mxu0 0
    %192 = vmatprep.subr.bf16.mxu0 0
    %193 = vmatpush1.bf16.msra.mxu0 0
    %194 = vmatprep.subr.bf16.mxu0 0
    %195 = vmatpush1.bf16.msra.mxu0 0
    %196 = vmatprep.subr.bf16.mxu0 0
    %197 = vmatpush1.bf16.msra.mxu0 0
    %198 = vmatprep.subr.bf16.mxu0 0
    %199 = vmatpush1.bf16.msra.mxu0 0
    %200 = vmatprep.subr.bf16.mxu0 0
    %201 = vmatpush1.bf16.msra.mxu0 0
    %202 = vmatprep.subr.bf16.mxu0 0
    %203 = vmatpush1.bf16.msra.mxu0 0
    %204 = vmatprep.mubr.bf16.mxu0 0
    %205 = vmatmul.mubr.bf16.gmra.mrb[0].mxu0 %v90
    %v206 = vpop.f32.mrb[0].mxu0
    %v207 = vadd.f32 %v79, %v206
    %v208 = vpop.f32.mrb[0].mxu0
    %v209 = vadd.f32 %v83, %v208
    %v210 = vpop.f32.mrb[0].mxu0
    %v211 = vadd.f32 %v79, %v210
    %v212 = vpop.f32.mrb[0].mxu0
    %v213 = vadd.f32 %v83, %v212
    %214 = vdwg.mxu0
    %v215 = vmax.f32 %v207, 0.0
    %v216 = vmax.f32 %v209, 0.0
    %v217 = vmax.f32 %v211, 0.0
    %v218 = vmax.f32 %v213, 0.0
    %v219 = vld [vmem:[#allocation2] sm:$0xff]
    %v220 = vld [vmem:[#allocation2 + $0x8] sm:$0xff]
    %v221 = vpack.c.bf16 %v217, %v215
    %v222 = vpack.c.bf16 %v218, %v216
    %v223 = vld [vmem:[#allocation6] sm:$0xf]
    %v224 = vld [vmem:[#allocation6 + $0x4] sm:$0xf]
    %v225 = vld [vmem:[#allocation6 + $0x8] sm:$0xf]
    %v226 = vld [vmem:[#allocation6 + $0xc] sm:$0xf]
    %v227 = vld [vmem:[#allocation6 + $0x10] sm:$0xf]
    %v228 = vld [vmem:[#allocation6 + $0x14] sm:$0xf]
    %v229 = vld [vmem:[#allocation6 + $0x18] sm:$0xf]
    %v230 = vld [vmem:[#allocation6 + $0x1c] sm:$0xf]
    %v231 = vld [vmem:[#allocation6 + $0x20] sm:$0xf]
    %v232 = vld [vmem:[#allocation6 + $0x24] sm:$0xf]
    %v233 = vld [vmem:[#allocation6 + $0x28] sm:$0xf]
    %v234 = vld [vmem:[#allocation6 + $0x2c] sm:$0xf]
    %v235 = vld [vmem:[#allocation6 + $0x30] sm:$0xf]
    %v236 = vld [vmem:[#allocation6 + $0x34] sm:$0xf]
    %v237 = vld [vmem:[#allocation6 + $0x38] sm:$0xf]
    %v238 = vld [vmem:[#allocation6 + $0x3c] sm:$0xf]
    %v239 = vld [vmem:[#allocation6 + $0x40] sm:$0xf]
    %v240 = vld [vmem:[#allocation6 + $0x44] sm:$0xf]
    %v241 = vld [vmem:[#allocation6 + $0x48] sm:$0xf]
    %v242 = vld [vmem:[#allocation6 + $0x4c] sm:$0xf]
    %v243 = vld [vmem:[#allocation6 + $0x50] sm:$0xf]
    %v244 = vld [vmem:[#allocation6 + $0x54] sm:$0xf]
    %v245 = vld [vmem:[#allocation6 + $0x58] sm:$0xf]
    %v246 = vld [vmem:[#allocation6 + $0x5c] sm:$0xf]
    %v247 = vld [vmem:[#allocation6 + $0x60] sm:$0xf]
    %v248 = vld [vmem:[#allocation6 + $0x64] sm:$0xf]
    %v249 = vld [vmem:[#allocation6 + $0x68] sm:$0xf]
    %v250 = vld [vmem:[#allocation6 + $0x6c] sm:$0xf]
    %v251 = vld [vmem:[#allocation6 + $0x70] sm:$0xf]
    %v252 = vld [vmem:[#allocation6 + $0x74] sm:$0xf]
    %v253 = vld [vmem:[#allocation6 + $0x78] sm:$0xf]
    %v254 = vld [vmem:[#allocation6 + $0x7c] sm:$0xf]
    %v287 = vunpack.c.l.b16 %v223
    %v288 = vunpack.c.l.b16 %v224
    %v289 = vunpack.c.l.b16 %v225
    %v290 = vunpack.c.l.b16 %v226
    %v291 = vunpack.c.l.b16 %v227
    %v292 = vunpack.c.l.b16 %v228
    %v293 = vunpack.c.l.b16 %v229
    %v294 = vunpack.c.l.b16 %v230
    %v295 = vunpack.c.l.b16 %v231
    %v296 = vunpack.c.l.b16 %v232
    %v297 = vunpack.c.l.b16 %v233
    %v298 = vunpack.c.l.b16 %v234
    %v299 = vunpack.c.l.b16 %v235
    %v300 = vunpack.c.l.b16 %v236
    %v301 = vunpack.c.l.b16 %v237
    %v302 = vunpack.c.l.b16 %v238
    %v303 = vunpack.c.l.b16 %v239
    %v304 = vunpack.c.l.b16 %v240
    %v305 = vunpack.c.l.b16 %v241
    %v306 = vunpack.c.l.b16 %v242
    %v307 = vunpack.c.l.b16 %v243
    %v308 = vunpack.c.l.b16 %v244
    %v309 = vunpack.c.l.b16 %v245
    %v310 = vunpack.c.l.b16 %v246
    %v311 = vunpack.c.l.b16 %v247
    %v312 = vunpack.c.l.b16 %v248
    %v313 = vunpack.c.l.b16 %v249
    %v314 = vunpack.c.l.b16 %v250
    %v315 = vunpack.c.l.b16 %v251
    %v316 = vunpack.c.l.b16 %v252
    %v317 = vunpack.c.l.b16 %v253
    %v318 = vunpack.c.l.b16 %v254
    %v319 = vpack.c.b16 %v288, %v287
    %v320 = vpack.c.b16 %v290, %v289
    %v321 = vpack.c.b16 %v292, %v291
    %v322 = vpack.c.b16 %v294, %v293
    %v323 = vpack.c.b16 %v296, %v295
    %v324 = vpack.c.b16 %v298, %v297
    %v325 = vpack.c.b16 %v300, %v299
    %v326 = vpack.c.b16 %v302, %v301
    %v327 = vpack.c.b16 %v304, %v303
    %v328 = vpack.c.b16 %v306, %v305
    %v329 = vpack.c.b16 %v308, %v307
    %v330 = vpack.c.b16 %v310, %v309
    %v331 = vpack.c.b16 %v312, %v311
    %v332 = vpack.c.b16 %v314, %v313
    %v333 = vpack.c.b16 %v316, %v315
    %v334 = vpack.c.b16 %v318, %v317
    %351 = vmatprep.subr.bf16.mxu0 0
    %352 = vmatpush1.bf16.msra.mxu0 %v319
    %353 = vmatprep.subr.bf16.mxu0 0
    %354 = vmatpush1.bf16.msra.mxu0 %v320
    %355 = vmatprep.subr.bf16.mxu0 0
    %356 = vmatpush1.bf16.msra.mxu0 %v321
    %357 = vmatprep.subr.bf16.mxu0 0
    %358 = vmatpush1.bf16.msra.mxu0 %v322
    %359 = vmatprep.subr.bf16.mxu0 0
    %360 = vmatpush1.bf16.msra.mxu0 %v323
    %361 = vmatprep.subr.bf16.mxu0 0
    %362 = vmatpush1.bf16.msra.mxu0 %v324
    %363 = vmatprep.subr.bf16.mxu0 0
    %364 = vmatpush1.bf16.msra.mxu0 %v325
    %365 = vmatprep.subr.bf16.mxu0 0
    %366 = vmatpush1.bf16.msra.mxu0 %v326
    %367 = vmatprep.subr.bf16.mxu0 0
    %368 = vmatpush1.bf16.msra.mxu0 %v327
    %369 = vmatprep.subr.bf16.mxu0 0
    %370 = vmatpush1.bf16.msra.mxu0 %v328
    %371 = vmatprep.subr.bf16.mxu0 0
    %372 = vmatpush1.bf16.msra.mxu0 %v329
    %373 = vmatprep.subr.bf16.mxu0 0
    %374 = vmatpush1.bf16.msra.mxu0 %v330
    %375 = vmatprep.subr.bf16.mxu0 0
    %376 = vmatpush1.bf16.msra.mxu0 %v331
    %377 = vmatprep.subr.bf16.mxu0 0
    %378 = vmatpush1.bf16.msra.mxu0 %v332
    %379 = vmatprep.subr.bf16.mxu0 0
    %380 = vmatpush1.bf16.msra.mxu0 %v333
    %381 = vmatprep.subr.bf16.mxu0 0
    %382 = vmatpush1.bf16.msra.mxu0 %v334
    %383 = vmatprep.mubr.bf16.mxu0 %v222
    %384 = vmatmul.mubr.bf16.gmra.mrb[0].mxu0 %v221
    %v385 = vpop.f32.mrb[0].mxu0
    %v386 = vadd.f32 0.0, %v385
    %v387 = vpop.f32.mrb[0].mxu0
    %v388 = vpop.f32.mrb[0].mxu0
    %v389 = vadd.f32 0.0, %v388
    %v390 = vpop.f32.mrb[0].mxu0
    %391 = vdwg.mxu0
    %v392 = vadd.f32 %v219, %v386
    %v393 = vadd.f32 %v220, %v389
    %394 = vst [vmem:[#allocation2] sm:$0xff] %v392
    %395 = vst [vmem:[#allocation2 + $0x8] sm:$0xff] %v393
    // Predicated region
    $region34: #{feed_forward.1} parent=1 // pred_check
      %p396 = pneg %p50
    $region35: #{feed_forward.1} parent=1 // pred_check_branch
      %398 = sbr.rel (%p396) target = $region37
    $region36: #{feed_forward.1} parent=1 // pred_region
      %v399 = vld [vmem:[#allocation2] sm:$0xff]
      %v400 = vld [vmem:[#allocation2 + $0x8] sm:$0xff]
      %v401 = vld [vmem:[%s4] sm:$0x1]
      %v403 = vlaneseq
      %v404 = vshrl.u32 %v403, 7
      %v405 = vsub.s32 0, %v404
      %v406 = vrot.slane %v401, %v405
      %v408 = vadd.f32 %v399, %v406
      %v409 = vadd.f32 %v400, %v406
      %410 = vst [vmem:[#allocation8] sm:$0xff] %v408
      %411 = vst [vmem:[#allocation8 + $0x8] sm:$0xff] %v409
    $region37: #{feed_forward.1} parent=1 // pred_fallthru
      _
    // Predicated region
    $region38: #{feed_forward.1} parent=1 // pred_check
      _
    $region39: #{feed_forward.1} parent=1 // pred_check_branch
      %413 = sbr.rel (0) target = $region41
    $region40: #{feed_forward.1} parent=1 // pred_region
      %s415 = ssub.s32 256, 256
      %416 = vsyncadd [#allocation5], %s415
      %s417 = sshll.u32 [#allocation8], 4
      %s418 = int_to_ptr.vmem [resolvable:$true] %s417
      %423 = dma.vmem_to_hbm [thread:$0]  %s418, 256, %s5, [#allocation5], 128, 128, 8
    $region41: #{feed_forward.1} parent=1 // pred_fallthru
      _
    // Predicated region
    $region42: #{feed_forward.1} parent=1 // pred_check
      _
    $region43: #{feed_forward.1} parent=1 // pred_check_branch
      %425 = sbr.rel (0) target = $region45
    $region44: #{feed_forward.1} parent=1 // pred_region
      %426 = dma.done [#allocation5], 256
    $region45: #{feed_forward.1} parent=1 // pred_fallthru
      _
    %427 = vsyncpa [#allocation4], 1
    %428 = vsyncpa [#allocation7], 1
    %429 = vsyncpa [#allocation5], 1

</llo_original>
